<compile_context>
chip_gen: v7x
topology: tpu7x:2x2x1
jax: 0.10.0
libtpu: 0.0.40
codegen_flags: <defaults>
</compile_context>

<pallas_src>
import math

import jax
import jax.numpy as jnp
from jax.experimental import pallas as pl
from jax.experimental.pallas import tpu as pltpu


# ----------------------------------------------------------------------------
# Pallas kernel: batch-tiled x @ W + b (lane-dense 2-D output).
# ----------------------------------------------------------------------------
def _hyper_linear_kernel(x_ref, w_ref, b_ref, o_ref):
    # x_ref: [TB, Din] (compute dtype), w_ref: [Din, Dout] (compute dtype),
    # b_ref: [1, Dout] (f32), o_ref: [TB, Dout] (f32).
    acc = jnp.dot(x_ref[...], w_ref[...], preferred_element_type=jnp.float32)
    o_ref[...] = (acc + b_ref[...]).astype(o_ref.dtype)


# ----------------------------------------------------------------------------
# Hypermodel head (tiny: K x out*in floats) -- plain XLA in the wrapper.
# ----------------------------------------------------------------------------
def _generate_base_layer(z, p):
    """Mirror HyperLinearLayer: use only the first z sample.

    Returns (gen_w, gen_b) with gen_w already transposed to [in, out] so the
    kernel does a plain row-major x @ W (no in-kernel relayout/transpose).
    """
    dout = p["wbt"].shape[1]
    din = p["wwt"].shape[1] // dout
    z0 = z[0:1].astype(jnp.float32)                     # [1, Z]
    w_flat = z0 @ p["wwt"] + p["bw"]                    # [1, out*in] (row-major over (o, i))
    gen_w = w_flat.reshape(dout, din).T                 # [in, out] == torch weight.T
    gen_b = z0 @ p["wbt"] + p["bb"]                     # [1, out]
    return gen_w, gen_b


# ----------------------------------------------------------------------------
# Wrapper: head in XLA, batch-gridded Pallas matmul for the base layer.
# ----------------------------------------------------------------------------
def hyper_linear_forward(x, z, params, *, compute_dtype=jnp.float32, block_b=None):
    x = x.astype(jnp.float32)
    B, din = x.shape

    gen_w, gen_b = _generate_base_layer(z, params)      # [din, dout] f32, [1, dout] f32
    dout = gen_w.shape[1]

    # Cast only the MXU operands (bf16 fast path on v6e/v7x); keep the bias add
    # and the output in f32 (VPU work stays f32, important on v5e).
    xc = x.astype(compute_dtype)
    wc = gen_w.astype(compute_dtype)
    gen_b = gen_b.astype(jnp.float32)

    # Batch tile: biggest that comfortably fits the smallest scoped-VMEM budget
    # (16 MiB default on v5e; 64 MiB physical on v7x). For these feature sizes
    # even TB=256 with double-buffering is tiny, so no vmem_limit_bytes needed.
    if block_b is None:
        tb = B if B <= 256 else 256
    else:
        tb = min(block_b, B)
    if tb != B and tb % 8 != 0:
        tb = max(8, (tb // 8) * 8)
    grid = (pl.cdiv(B, tb),)

    itemsize = jnp.dtype(compute_dtype).itemsize
    cost = pl.CostEstimate(
        flops=2 * B * din * dout,
        transcendentals=0,
        bytes_accessed=B * din * itemsize + din * dout * itemsize
        + dout * 4 + B * dout * 4,
    )

    h = pl.pallas_call(
        _hyper_linear_kernel,
        out_shape=jax.ShapeDtypeStruct((B, dout), jnp.float32),
        grid_spec=pltpu.PrefetchScalarGridSpec(
            num_scalar_prefetch=0,
            grid=grid,
            in_specs=[
                pl.BlockSpec((tb, din), lambda i: (i, 0)),    # states tile: pipelined
                pl.BlockSpec((din, dout), lambda i: (0, 0)),  # generated weight: resident
                pl.BlockSpec((1, dout), lambda i: (0, 0)),    # generated bias: resident
            ],
            out_specs=pl.BlockSpec((tb, dout), lambda i: (i, 0)),  # lane-dense 2-D output
        ),
        compiler_params=pltpu.CompilerParams(
            dimension_semantics=("parallel",),  # shard batch grid across TCs on v7x
        ),
        cost_estimate=cost,
    )(xc, wc, gen_b)
    return h


# ----------------------------------------------------------------------------
# Parameter construction (mirrors the module's 'tf' init; hyper weights are
# stored pre-transposed as [z_size, num_param] so the head is a plain z @ W).
# ----------------------------------------------------------------------------
def init_params(key, z_size, out_features, in_features):
    # HyperLinearWeight 'tf' init: trunc_normal(std=1/sqrt(f_in)), f_in = in_features; bias zeros.
    bound = 1.0 / math.sqrt(in_features)
    wwt = bound * jax.random.truncated_normal(
        key, -2.0, 2.0, (z_size, out_features * in_features), jnp.float32)
    return dict(
        wwt=wwt,                                                   # [Z, out*in]
        bw=jnp.zeros((1, out_features * in_features), jnp.float32),
        # HyperLinearBias 'tf' init: weight zeros, bias zeros.
        wbt=jnp.zeros((z_size, out_features), jnp.float32),        # [Z, out]
        bb=jnp.zeros((1, out_features), jnp.float32),
    )


# Pure-JAX reference (same cast pattern as the kernel path).
def hyper_linear_reference(x, z, p, compute_dtype=jnp.float32):
    gen_w, gen_b = _generate_base_layer(z, p)
    h = jnp.dot(x.astype(jnp.float32).astype(compute_dtype),
                gen_w.astype(compute_dtype),
                preferred_element_type=jnp.float32) + gen_b
    return h


if __name__ == "__main__":
    # Small shapes consistent with the DeepSea hyper-DQN head:
    #   base layer output_shape = (out_features, in_features) = (32, 64).
    B = 16
    in_features = 64
    out_features = 32
    z_size = 16
    K = 4  # number of z samples passed in; the module uses only z[0]

    key = jax.random.PRNGKey(0)
    kp, kx, kz, kb1, kb2, kb3 = jax.random.split(key, 6)

    params = init_params(kp, z_size, out_features, in_features)
    # 'tf' init zeroes the bias hypernet and both bias vectors; perturb them so
    # the correctness check exercises every term of the forward pass.
    params["bw"] = 0.1 * jax.random.normal(kb1, params["bw"].shape, jnp.float32)
    params["wbt"] = 0.1 * jax.random.normal(kb2, params["wbt"].shape, jnp.float32)
    params["bb"] = 0.1 * jax.random.normal(kb3, params["bb"].shape, jnp.float32)

    x = jax.random.normal(kx, (B, in_features), jnp.float32)
    z = jax.random.normal(kz, (K, z_size), jnp.float32)

    # f32 path with a multi-step batch grid (block_b=8 -> 2 grid steps).
    h = jax.block_until_ready(
        hyper_linear_forward(x, z, params, compute_dtype=jnp.float32, block_b=8))
    h_ref = hyper_linear_reference(x, z, params, compute_dtype=jnp.float32)
    assert h.shape == (B, out_features), h.shape
    assert jnp.allclose(h, h_ref, atol=1e-4, rtol=1e-4), \
        float(jnp.max(jnp.abs(h - h_ref)))

    # bf16 MXU path (v6e/v7x fast path), f32 accumulation / f32 output.
    h_bf = jax.block_until_ready(
        hyper_linear_forward(x, z, params, compute_dtype=jnp.bfloat16))
    h_bf_ref = hyper_linear_reference(x, z, params, compute_dtype=jnp.bfloat16)
    assert h_bf.shape == (B, out_features), h_bf.shape
    assert jnp.allclose(h_bf, h_bf_ref, atol=1e-3, rtol=1e-3), \
        float(jnp.max(jnp.abs(h_bf - h_bf_ref)))
    assert jnp.allclose(h_bf, h_ref, atol=5e-2, rtol=5e-2), \
        float(jnp.max(jnp.abs(h_bf - h_ref)))

    print("KERNEL_OK")
</pallas_src>

<mosaic_0001>
module attributes {stable_mosaic.version = 11 : i64} {
  func.func @_hyper_linear_kernel(%arg0: i32, %arg1: memref<8x64xf32, #tpu.memory_space<vmem>>, %arg2: memref<64x32xf32, #tpu.memory_space<vmem>>, %arg3: memref<1x32xf32, #tpu.memory_space<vmem>>, %arg4: memref<8x32xf32, #tpu.memory_space<vmem>>) attributes {dimension_semantics = [#tpu.dimension_semantics<parallel>], iteration_bounds = array<i64: 2>, scalar_prefetch = 0 : i64, scratch_operands = 0 : i64, tpu.core_type = #tpu.core_type<tc>, window_params = [{transform_indices = @transform_0, window_bounds = array<i64: 8, 64>}, {pipeline_mode = #tpu.pipeline_mode<synchronous>, transform_indices = @transform_1, window_bounds = array<i64: 64, 32>}, {pipeline_mode = #tpu.pipeline_mode<synchronous>, transform_indices = @transform_2, window_bounds = array<i64: 1, 32>}, {transform_indices = @transform_3, window_bounds = array<i64: 8, 32>}]} {
    %c0 = arith.constant 0 : index
    %c0_0 = arith.constant 0 : index
    %0 = vector.load %arg1[%c0, %c0_0] : memref<8x64xf32, #tpu.memory_space<vmem>>, vector<8x64xf32>
    %c0_1 = arith.constant 0 : index
    %c0_2 = arith.constant 0 : index
    %1 = vector.load %arg2[%c0_1, %c0_2] : memref<64x32xf32, #tpu.memory_space<vmem>>, vector<64x32xf32>
    %cst = arith.constant dense<0.000000e+00> : vector<8x32xf32>
    %2 = tpu.matmul %0, %1, %cst {dimension_numbers = #tpu.dot_dimension_numbers<[1], [0], [0], [1], [0, 0, 1, 1], [], []>} : vector<8x64xf32>, vector<64x32xf32>, vector<8x32xf32> -> vector<8x32xf32>
    %c0_3 = arith.constant 0 : index
    %c0_4 = arith.constant 0 : index
    %3 = vector.load %arg3[%c0_3, %c0_4] : memref<1x32xf32, #tpu.memory_space<vmem>>, vector<1x32xf32>
    %4 = vector.broadcast %3 : vector<1x32xf32> to vector<8x32xf32>
    %5 = arith.addf %2, %4 : vector<8x32xf32>
    %c0_5 = arith.constant 0 : index
    %c0_6 = arith.constant 0 : index
    %6 = vector.load %arg4[%c0_5, %c0_6] : memref<8x32xf32, #tpu.memory_space<vmem>>, vector<8x32xf32>
    tpu.vector_store %arg4[%c0_5, %c0_6], %5 {strides = array<i32>} : memref<8x32xf32, #tpu.memory_space<vmem>>, vector<8x32xf32>,
    return
  }
  func.func @transform_0(%arg0: i32) -> (i32, i32) {
    %c0_i32 = arith.constant 0 : i32
    %c0_i32_0 = arith.constant 0 : i32
    return %arg0, %c0_i32 : i32, i32
  }
  func.func @transform_1(%arg0: i32) -> (i32, i32) {
    %c0_i32 = arith.constant 0 : i32
    %c0_i32_0 = arith.constant 0 : i32
    %c0_i32_1 = arith.constant 0 : i32
    return %c0_i32, %c0_i32_0 : i32, i32
  }
  func.func @transform_2(%arg0: i32) -> (i32, i32) {
    %c0_i32 = arith.constant 0 : i32
    %c0_i32_0 = arith.constant 0 : i32
    %c0_i32_1 = arith.constant 0 : i32
    return %c0_i32, %c0_i32_0 : i32, i32
  }
  func.func @transform_3(%arg0: i32) -> (i32, i32) {
    %c0_i32 = arith.constant 0 : i32
    %c0_i32_0 = arith.constant 0 : i32
    return %arg0, %c0_i32 : i32, i32
  }
}

</mosaic_0001>

<llo_original>
// kernel: tpu_custom_call.1
$region0: #{tpu_custom_call.1}
  #allocation0 [shape = 'u32[]', space=smem, size = 0x4, offset = 0x4, fixed_abs, tag = 'smem constant byte address 0x4 - core index']
  #allocation1 [shape = 'u32[144,128]{1,0:T(1,128)}', space=vmem, size = 0x12000, scoped, tag = 'internal scratch']
  %s0 = inlined_call_operand.vmem [shape: f32[16,64], index: 0, kind: input, shape index: {}]
  %s1 = inlined_call_operand.vmem [shape: f32[64,32], index: 1, kind: input, shape index: {}]
  %s2 = inlined_call_operand.vmem [shape: f32[1,32], index: 2, kind: input, shape index: {}]
  %s3 = inlined_call_operand.hbm [shape: f32[16,32], index: 3, kind: output, shape index: {}]
  %s4 = sld [smem:[#allocation0]]
  $region45: #{tpu_custom_call.1} parent=0
    _
  %s6 = ssub.s32 1, %s4
  %s7 = scalar_select 0, %s6, %s4
  $region1: #{tpu_custom_call.1} parent=0
    #allocation2 [shape = 'u8[8192]{0}', space=vmem, size = 0x2000, scoped, tag = 'output window, operand 0']
    #allocation3 [shape = 's32[2]{0}', space=sflag, size = 0x8, scoped, tag = 'scoped memory for tpu_custom_call.1']
    %8 = vsyncpa [#allocation3], 0
    %s9 = scalar_lea.sflag [#allocation3], 1
    %10 = vsyncpa %s9, 0
    loop: start=0, step=1, limit=4
    $region2: #{tpu_custom_call.1} parent=1 // loop_pre_header
      _
    $region3: #{tpu_custom_call.1} parent=1 // loop_header
      %s12 = sphi 0, %s16
      %p13 = scmp.ge.s32.totalorder %s12, 4
      %s22 = sphi 0, %s24
      %s25 = sphi 0, %s22
      %s26 = sphi 0, %s25
      %s42 = sphi 0, %s26
      %s46 = sphi 0, %s46
      %s48 = sphi 0, %s46
      %s49 = sphi 0, %s48
      %s63 = sphi 0, %s49
      %s67 = sphi 0, %s67
      %s69 = sphi 0, %s67
      %s70 = sphi 0, %s69
      %s84 = sphi 0, %s70
      %s90 = sphi 0, %s92
      %s93 = sphi 0, %s90
      %s94 = sphi 0, %s93
      %s110 = sphi 0, %s94
    $region4: #{tpu_custom_call.1} parent=1 // loop_header_branch
      %15 = sbr.rel (%p13) target = $region8
    $region5: #{tpu_custom_call.1} parent=1 // loop_body
      %s17 = ssub.s32 %s12, 1
      %s18 = ssub.s32 %s12, 2
      %s19 = sadd.s32 %s12, 1
      %s20 = ssub.s32 %s12, %s19
      %p21 = scmp.eq.s32.totalorder %s20, 0
      %s23 = sadd.s32 %s22, 1
      %s24 = scalar_select %p21, %s22, %s23
      %p27 = pneg %p21
      %p28 = scmp.eq.s32.totalorder %s12, 1
      %p29 = por %p27, %p28
      %p30 = scmp.ne.s32.totalorder %s22, %s25
      %p31 = scmp.eq.s32.totalorder %s12, 0
      %p32 = por %p30, %p31
      %p33 = scmp.ne.s32.totalorder %s22, %s25
      %p34 = scmp.eq.s32.totalorder %s17, 1
      %p35 = por %p33, %p34
      %p36 = scmp.ne.s32.totalorder %s25, %s26
      %p37 = scmp.eq.s32.totalorder %s17, 0
      %p38 = por %p36, %p37
      %p39 = scmp.ne.s32.totalorder %s25, %s26
      %p40 = scmp.eq.s32.totalorder %s18, 1
      %p41 = por %p39, %p40
      %p43 = scmp.ne.s32.totalorder %s26, %s42
      %p44 = scmp.eq.s32.totalorder %s18, 0
      %p45 = por %p43, %p44
      %s47 = sadd.s32 %s46, 1
      %p50 = scmp.eq.s32.totalorder %s12, 1
      %p51 = scmp.ne.s32.totalorder %s46, %s48
      %p52 = scmp.eq.s32.totalorder %s12, 0
      %p53 = por %p51, %p52
      %p54 = scmp.ne.s32.totalorder %s46, %s48
      %p55 = scmp.eq.s32.totalorder %s17, 1
      %p56 = por %p54, %p55
      %p57 = scmp.ne.s32.totalorder %s48, %s49
      %p58 = scmp.eq.s32.totalorder %s17, 0
      %p59 = por %p57, %p58
      %p60 = scmp.ne.s32.totalorder %s48, %s49
      %p61 = scmp.eq.s32.totalorder %s18, 1
      %p62 = por %p60, %p61
      %p64 = scmp.ne.s32.totalorder %s49, %s63
      %p65 = scmp.eq.s32.totalorder %s18, 0
      %p66 = por %p64, %p65
      %s68 = sadd.s32 %s67, 1
      %p71 = scmp.eq.s32.totalorder %s12, 1
      %p72 = scmp.ne.s32.totalorder %s67, %s69
      %p73 = scmp.eq.s32.totalorder %s12, 0
      %p74 = por %p72, %p73
      %p75 = scmp.ne.s32.totalorder %s67, %s69
      %p76 = scmp.eq.s32.totalorder %s17, 1
      %p77 = por %p75, %p76
      %p78 = scmp.ne.s32.totalorder %s69, %s70
      %p79 = scmp.eq.s32.totalorder %s17, 0
      %p80 = por %p78, %p79
      %p81 = scmp.ne.s32.totalorder %s69, %s70
      %p82 = scmp.eq.s32.totalorder %s18, 1
      %p83 = por %p81, %p82
      %p85 = scmp.ne.s32.totalorder %s70, %s84
      %p86 = scmp.eq.s32.totalorder %s18, 0
      %p87 = por %p85, %p86
      %s88 = ssub.s32 %s12, %s19
      %p89 = scmp.eq.s32.totalorder %s88, 0
      %s91 = sadd.s32 %s90, 1
      %s92 = scalar_select %p89, %s90, %s91
      %p95 = pneg %p89
      %p96 = scmp.eq.s32.totalorder %s12, 1
      %p97 = por %p95, %p96
      %p98 = scmp.ne.s32.totalorder %s90, %s93
      %p99 = scmp.eq.s32.totalorder %s12, 0
      %p100 = por %p98, %p99
      %p101 = scmp.ne.s32.totalorder %s90, %s93
      %p102 = scmp.eq.s32.totalorder %s17, 1
      %p103 = por %p101, %p102
      %p104 = scmp.ne.s32.totalorder %s93, %s94
      %p105 = scmp.eq.s32.totalorder %s17, 0
      %p106 = por %p104, %p105
      %p107 = scmp.ne.s32.totalorder %s93, %s94
      %p108 = scmp.eq.s32.totalorder %s18, 1
      %p109 = por %p107, %p108
      %p111 = scmp.ne.s32.totalorder %s94, %s110
      %p112 = scmp.eq.s32.totalorder %s18, 0
      %p113 = por %p111, %p112
      %p114 = scmp.le.s32.totalorder 1, %s12
      %p115 = scmp.lt.s32.totalorder %s12, 3
      %p116 = pnand %p114, %p115
      %p117 = pneg %p116
      // Predicated region
      $region9: #{tpu_custom_call.1} parent=5 // pred_check
        _
      $region10: #{tpu_custom_call.1} parent=5 // pred_check_branch
        %119 = sbr.rel (%p116) target = $region12
      $region11: #{tpu_custom_call.1} parent=5 // pred_region
        %s120 = ssub.s32 %s12, 1
        // Predicated region
        $region13: #{tpu_custom_call.1} parent=11 // pred_check
          %p121 = pneg %p59
        $region14: #{tpu_custom_call.1} parent=11 // pred_check_branch
          %123 = sbr.rel (%p121) target = $region16
        $region15: #{tpu_custom_call.1} parent=11 // pred_region
          _
        $region16: #{tpu_custom_call.1} parent=11 // pred_fallthru
          _
        // Predicated region
        $region17: #{tpu_custom_call.1} parent=11 // pred_check
          %p124 = pneg %p80
        $region18: #{tpu_custom_call.1} parent=11 // pred_check_branch
          %126 = sbr.rel (%p124) target = $region20
        $region19: #{tpu_custom_call.1} parent=11 // pred_region
          _
        $region20: #{tpu_custom_call.1} parent=11 // pred_fallthru
          _
      $region12: #{tpu_custom_call.1} parent=5 // pred_fallthru
        _
      %p127 = scmp.lt.s32.totalorder %s12, 2
      // Predicated region
      $region21: #{tpu_custom_call.1} parent=5 // pred_check
        %p128 = pneg %p127
      $region22: #{tpu_custom_call.1} parent=5 // pred_check_branch
        %130 = sbr.rel (%p128) target = $region24
      $region23: #{tpu_custom_call.1} parent=5 // pred_region
        // Predicated region
        $region25: #{tpu_custom_call.1} parent=23 // pred_check
          %p131 = pneg %p32
        $region26: #{tpu_custom_call.1} parent=23 // pred_check_branch
          %133 = sbr.rel (%p131) target = $region28
        $region27: #{tpu_custom_call.1} parent=23 // pred_region
          %p134 = scmp.lt.s32.totalorder %s12, 1
          %s135 = scalar_select %p134, %s12, 1
          %s136 = smul.addr %s135, 8
          %s137 = scalar_lea.vmem %s0, %s136
        $region28: #{tpu_custom_call.1} parent=23 // pred_fallthru
          _
      $region24: #{tpu_custom_call.1} parent=5 // pred_fallthru
        _
      %p138 = scmp.le.s32.totalorder 1, %s12
      %p139 = scmp.lt.s32.totalorder %s12, 3
      %p140 = pnand %p138, %p139
      %p141 = pneg %p140
      // Predicated region
      $region29: #{tpu_custom_call.1} parent=5 // pred_check
        _
      $region30: #{tpu_custom_call.1} parent=5 // pred_check_branch
        %143 = sbr.rel (%p140) target = $region32
      $region31: #{tpu_custom_call.1} parent=5 // pred_region
        %s144 = ssub.s32 %s12, 1
        %p145 = scmp.lt.s32.totalorder %s17, 1
        %s146 = scalar_select %p145, %s17, 1
        %s147 = smul.addr %s146, 8
        %s148 = scalar_lea.vmem %s0, %s147
        %p149 = pneg %p38
        %p150 = pneg %p35
        %p151 = pneg %p59
        %p152 = pneg %p56
        %p153 = pneg %p80
        %p154 = pneg %p77
        %p155 = pneg %p106
        %p156 = pneg %p103
        %s157 = sand.u32 %s93, 1
        %s158 = scalar_lea.sflag [#allocation3], %s157
        %s159 = sand.u32 %s93, 1
        %s160 = smul.addr %s159, 8
        %s161 = scalar_lea.vmem [#allocation2], %s160
        %p162 = scmp.lt.s32.totalorder %s17, 1
        %s163 = scalar_select %p162, %s17, 1
        %s164 = smul.addr %s163, 8
        %s165 = scalar_lea.vmem %s0, %s164
        %v166 = vld [vmem:[%s165] sm:$0xff]
        %v167 = vld [vmem:[%s1] sm:$0xff]
        %v168 = vld [vmem:[%s1 + $0x8] sm:$0xff]
        %v169 = vld [vmem:[%s1 + $0x10] sm:$0xff]
        %v170 = vld [vmem:[%s1 + $0x18] sm:$0xff]
        %v171 = vld [vmem:[%s1 + $0x20] sm:$0xff]
        %v172 = vld [vmem:[%s1 + $0x28] sm:$0xff]
        %v173 = vld [vmem:[%s1 + $0x30] sm:$0xff]
        %v174 = vld [vmem:[%s1 + $0x38] sm:$0xff]
        %v175 = vld [vmem:[%s2] sm:$0x1]
        %v177 = vlaneseq
        %v178 = vshrl.u32 %v177, 7
        %v179 = vsub.s32 0, %v178
        %v180 = vrot.slane %v175, %v179
        %vm182 = vcmask 523264
        %v184 = vsel %vm182, %v166, 0
        %186 = vmatprep.subr.mxu0 0.0
        %187 = vmatpush1.msra.mxu0 %v167
        %188 = vmatprep.subr.mxu0 0.0
        %189 = vmatpush1.msra.mxu0 %v168
        %190 = vmatprep.subr.mxu0 0.0
        %191 = vmatpush1.msra.mxu0 %v169
        %192 = vmatprep.subr.mxu0 0.0
        %193 = vmatpush1.msra.mxu0 %v170
        %194 = vmatprep.subr.mxu0 0.0
        %195 = vmatpush1.msra.mxu0 %v171
        %196 = vmatprep.subr.mxu0 0.0
        %197 = vmatpush1.msra.mxu0 %v172
        %198 = vmatprep.subr.mxu0 0.0
        %199 = vmatpush1.msra.mxu0 %v173
        %200 = vmatprep.subr.mxu0 0.0
        %201 = vmatpush1.msra.mxu0 %v174
        %202 = vmatprep.subr.mxu0 0.0
        %203 = vmatpush1.msra.mxu0 0.0
        %204 = vmatprep.subr.mxu0 0.0
        %205 = vmatpush1.msra.mxu0 0.0
        %206 = vmatprep.subr.mxu0 0.0
        %207 = vmatpush1.msra.mxu0 0.0
        %208 = vmatprep.subr.mxu0 0.0
        %209 = vmatpush1.msra.mxu0 0.0
        %210 = vmatprep.subr.mxu0 0.0
        %211 = vmatpush1.msra.mxu0 0.0
        %212 = vmatprep.subr.mxu0 0.0
        %213 = vmatpush1.msra.mxu0 0.0
        %214 = vmatprep.subr.mxu0 0.0
        %215 = vmatpush1.msra.mxu0 0.0
        %216 = vmatprep.subr.mxu0 0.0
        %217 = vmatpush1.msra.mxu0 0.0
        %218 = vmatprep.subr.mxu0 0.0
        %219 = vmatpush1.msra.mxu0 0.0
        %220 = vmatprep.subr.mxu0 0.0
        %221 = vmatpush1.msra.mxu0 0.0
        %222 = vmatprep.subr.mxu0 0.0
        %223 = vmatpush1.msra.mxu0 0.0
        %224 = vmatprep.subr.mxu0 0.0
        %225 = vmatpush1.msra.mxu0 0.0
        %226 = vmatprep.subr.mxu0 0.0
        %227 = vmatpush1.msra.mxu0 0.0
        %228 = vmatprep.subr.mxu0 0.0
        %229 = vmatpush1.msra.mxu0 0.0
        %230 = vmatprep.subr.mxu0 0.0
        %231 = vmatpush1.msra.mxu0 0.0
        %232 = vmatprep.subr.mxu0 0.0
        %233 = vmatpush1.msra.mxu0 0.0
        %234 = vmatprep.subr.mxu0 0.0
        %235 = vmatpush1.msra.mxu0 0.0
        %236 = vmatprep.subr.mxu0 0.0
        %237 = vmatpush1.msra.mxu0 0.0
        %238 = vmatprep.subr.mxu0 0.0
        %239 = vmatpush1.msra.mxu0 0.0
        %240 = vmatprep.subr.mxu0 0.0
        %241 = vmatpush1.msra.mxu0 0.0
        %242 = vmatprep.subr.mxu0 0.0
        %243 = vmatpush1.msra.mxu0 0.0
        %244 = vmatprep.subr.mxu0 0.0
        %245 = vmatpush1.msra.mxu0 0.0
        %246 = vmatprep.subr.mxu0 0.0
        %247 = vmatpush1.msra.mxu0 0.0
        %248 = vmatprep.subr.mxu0 0.0
        %249 = vmatpush1.msra.mxu0 0.0
        %250 = vmatprep.mubr.f32.mxu0 0.0
        %251 = vmatmul.mubr.f32.gmra.mrb[0].mxu0 %v184
        %v252 = vpop.f32.mrb[0].mxu0
        %v253 = vadd.f32 %v180, %v252
        %v254 = vpop.f32.mrb[0].mxu0
        %255 = vdwg.mxu0
        %vm256 = vcmask 261120
        %257 = vst.msk [vmem:[%s161] sm:$0xff] %vm256, %v253
        %s258 = sand.u32 %s93, 1
        %s259 = scalar_lea.sflag [#allocation3], %s258
        %s260 = sand.u32 %s93, 1
        %s261 = smul.addr %s260, 8
        %s262 = scalar_lea.vmem [#allocation2], %s261
        // Predicated region
        $region33: #{tpu_custom_call.1} parent=31 // pred_check
          %p263 = pneg %p103
        $region34: #{tpu_custom_call.1} parent=31 // pred_check_branch
          %265 = sbr.rel (%p263) target = $region36
        $region35: #{tpu_custom_call.1} parent=31 // pred_region
          %s267 = ssub.s32 128, 128
          %268 = vsyncadd %s259, %s267
          %s269 = smul.addr %s17, 128
          %s270 = scalar_lea.hbm %s3, %s269
          %s272 = sshll.u32 %s262, 4
          %s273 = int_to_ptr.vmem [resolvable:$true] %s272
          %275 = dma.vmem_to_hbm [thread:$0]  %s273, 128, %s270, %s259
        $region36: #{tpu_custom_call.1} parent=31 // pred_fallthru
          _
      $region32: #{tpu_custom_call.1} parent=5 // pred_fallthru
        _
      %p276 = scmp.le.s32.totalorder 2, %s12
      // Predicated region
      $region37: #{tpu_custom_call.1} parent=5 // pred_check
        %p277 = pneg %p276
      $region38: #{tpu_custom_call.1} parent=5 // pred_check_branch
        %279 = sbr.rel (%p277) target = $region40
      $region39: #{tpu_custom_call.1} parent=5 // pred_region
        %s280 = ssub.s32 %s12, 2
        // Predicated region
        $region41: #{tpu_custom_call.1} parent=39 // pred_check
          %p281 = pneg %p109
        $region42: #{tpu_custom_call.1} parent=39 // pred_check_branch
          %283 = sbr.rel (%p281) target = $region44
        $region43: #{tpu_custom_call.1} parent=39 // pred_region
          %s284 = sand.u32 %s94, 1
          %s285 = scalar_lea.sflag [#allocation3], %s284
          %s286 = sand.u32 %s94, 1
          %s287 = smul.addr %s286, 8
          %s288 = scalar_lea.vmem [#allocation2], %s287
          %289 = dma.done %s285, 128
        $region44: #{tpu_custom_call.1} parent=39 // pred_fallthru
          _
      $region40: #{tpu_custom_call.1} parent=5 // pred_fallthru
        _
    $region6: #{tpu_custom_call.1} parent=1 // loop_footer
      %s16 = sadd.s32 1, %s12
    $region7: #{tpu_custom_call.1} parent=1 // loop_footer_branch
      %11 = sbr.rel target = $region3
    $region8: #{tpu_custom_call.1} parent=1 // loop_exit
      _
    %290 = vsyncpa [#allocation3], 1
    %s291 = scalar_lea.sflag [#allocation3], 1
    %292 = vsyncpa %s291, 1

</llo_original>
